<compile_context>
chip_gen: v6e
topology: v6e:2x2x1
jax: 0.10.0
libtpu: 0.0.40
codegen_flags: <defaults>
</compile_context>

<pallas_src>
import jax
import jax.numpy as jnp
from jax import lax
from jax.experimental import pallas as pl
from jax.experimental.pallas import tpu as pltpu


def _round_up(x, m):
    return (x + m - 1) // m * m


def _choose_tile_rows(sp, b, max_rows=512):
    """Rows per output tile.

    Returns TQ such that TQ % 8 == 0 and either TQ divides `sp` (tile stays
    inside one sequence) or TQ = k*sp with k dividing `b` (tile spans whole
    sequences), so a tile never straddles a sequence boundary mid-way.
    """
    tq = 8
    for t in range(8, min(sp, max_rows) + 1, 8):
        if sp % t == 0:
            tq = t
    if tq == sp and sp < max_rows:
        k = 1
        for cand in range(2, b + 1):
            if b % cand == 0 and sp * cand <= max_rows:
                k = cand
        tq = sp * k
    return tq


def embeddings_forward(input_ids, token_table, pos_table, *, onehot_vocab_max=2048):
    """Eval-mode forward of `Embeddings` (dropout == identity).

    input_ids:   [B, S] integer token ids
    token_table: [V, D] token embedding table
    pos_table:   [max_seq_len, D] position embedding table
    returns:     [B, S, D]
    """
    B, S = input_ids.shape
    V, D = token_table.shape
    max_seq_len = pos_table.shape[0]
    assert S <= max_seq_len, "sequence longer than position table"

    dtype = token_table.dtype
    itemsize = jnp.dtype(dtype).itemsize

    # ---- layout: lane-dense embedding dim, sublane-friendly sequence length ----
    Dp = _round_up(D, 128)          # lane-dense output tiles (unmasked vst)
    Sp = _round_up(S, 8)            # sublane-friendly row tiles
    pad_d = Dp - D
    pad_s = Sp - S

    tok = token_table if pad_d == 0 else jnp.pad(token_table, ((0, 0), (0, pad_d)))
    pos_sel = pos_table[:S]
    if pad_d or pad_s:
        pos_sel = jnp.pad(pos_sel, ((0, pad_s), (0, pad_d)))

    TQ = _choose_tile_rows(Sp, B)
    Np = B * Sp
    n_tiles = Np // TQ
    # Position rows one tile needs; if a tile spans k whole sequences, pre-tile.
    P_rows = max(Sp, TQ)
    pos_block = pos_sel if P_rows == Sp else jnp.tile(pos_sel, (P_rows // Sp, 1))

    # Flatten ids row-major over (B, Sp) so each TQ-tile covers contiguous rows.
    ids = input_ids.astype(jnp.int32)
    if pad_s:
        ids = jnp.pad(ids, ((0, 0), (0, pad_s)))
    # PyTorch raises on out-of-range ids; TPU VMEM reads are not bounds-checked,
    # so clamp defensively (the one-hot path is inherently OOB-safe anyway).
    ids_flat = jnp.clip(ids.reshape(Np), 0, V - 1)

    use_onehot = V <= onehot_vocab_max

    # ---- VMEM budget: single-buffered residents + double-buffered out tiles ----
    resident = (V * Dp + P_rows * Dp) * itemsize
    pipelined = 2 * TQ * Dp * itemsize + 2 * TQ * 4 + (2 << 20)
    needed = resident + pipelined
    try:
        vmem_cap = int(pltpu.get_tpu_info().vmem_capacity_bytes)
    except Exception:
        vmem_cap = 64 << 20          # conservative default (v7x)
    vmem_limit = int(min(max(needed, 32 << 20), int(vmem_cap * 0.92)))
    # TODO(synk): if `needed` does not fit VMEM (huge vocab on v7x's 64 MiB),
    # move the token table to memory_space=pl.ANY and DMA-gather row groups
    # with pltpu.make_async_copy instead of keeping it resident.

    cost = pl.CostEstimate(
        flops=(2 * Np * V * Dp) if use_onehot else (Np * Dp),
        transcendentals=0,
        bytes_accessed=(Np * Dp + V * Dp + P_rows * Dp) * itemsize + 4 * Np,
    )
    compiler_params = pltpu.CompilerParams(
        dimension_semantics=("parallel",),
        vmem_limit_bytes=vmem_limit,
    )
    out_shape = jax.ShapeDtypeStruct((Np, Dp), dtype)
    resident_spec = pl.BlockSpec(memory_space=pltpu.MemorySpace.VMEM)

    if use_onehot:
        # -------- one-hot MXU gather: one dense (TQ, Dp) tile per step --------
        def onehot_kernel(ids_ref, tok_ref, pos_ref, o_ref):
            i = pl.program_id(0)
            ids_col = ids_ref[...]                                    # (TQ, 1)
            one_hot = (
                ids_col == lax.broadcasted_iota(jnp.int32, (TQ, V), 1)
            ).astype(tok_ref.dtype)                                   # (TQ, V)
            tok_tile = jnp.dot(
                one_hot, tok_ref[...],
                preferred_element_type=jnp.float32,
                precision=lax.Precision.HIGHEST,
            )                                                         # (TQ, Dp)
            if TQ % Sp == 0:
                start = 0
            else:
                start = pl.multiple_of((i % (Sp // TQ)) * TQ, 8)
            pos_tile = pos_ref[pl.ds(start, TQ), :].astype(jnp.float32)
            o_ref[...] = (tok_tile + pos_tile).astype(o_ref.dtype)
            # TODO(synk): training-mode dropout would draw a mask here with
            # pltpu.prng_seed + pltpu.prng_random_bits and scale by 1/(1-p).

        grid_spec = pltpu.PrefetchScalarGridSpec(
            num_scalar_prefetch=0,
            grid=(n_tiles,),
            in_specs=[
                pl.BlockSpec((TQ, 1), lambda i: (i, 0)),   # ids column tile
                resident_spec,                             # token table (VMEM)
                resident_spec,                             # position rows (VMEM)
            ],
            out_specs=pl.BlockSpec((TQ, Dp), lambda i: (i, 0)),
        )
        out_flat = pl.pallas_call(
            onehot_kernel,
            out_shape=out_shape,
            grid_spec=grid_spec,
            compiler_params=compiler_params,
            cost_estimate=cost,
        )(ids_flat.reshape(Np, 1), tok, pos_block)
    else:
        # ---- large vocab: in-kernel row gather from the resident table ----
        def gather_kernel(ids_ref, tok_ref, pos_ref, o_ref):
            i = pl.program_id(0)
            base = i * TQ

            def body(r, carry):
                tid = ids_ref[base + r]
                o_ref[pl.ds(r, 1), :] = tok_ref[pl.ds(tid, 1), :]
                return carry

            lax.fori_loop(0, TQ, body, 0, unroll=8)
            if TQ % Sp == 0:
                start = 0
            else:
                start = pl.multiple_of((i % (Sp // TQ)) * TQ, 8)
            # Hoisted position add: one dense VPU pass over the whole tile.
            o_ref[...] = o_ref[...] + pos_ref[pl.ds(start, TQ), :]

        grid_spec = pltpu.PrefetchScalarGridSpec(
            num_scalar_prefetch=1,                     # ids land in SMEM
            grid=(n_tiles,),
            in_specs=[resident_spec, resident_spec],
            out_specs=pl.BlockSpec((TQ, Dp), lambda i, ids: (i, 0)),
        )
        out_flat = pl.pallas_call(
            gather_kernel,
            out_shape=out_shape,
            grid_spec=grid_spec,
            compiler_params=compiler_params,
            cost_estimate=cost,
        )(ids_flat, tok, pos_block)

    out = out_flat.reshape(B, Sp, Dp)
    if pad_s or pad_d:
        out = out[:, :S, :D]   # only pay this extra pass when padding was added
    return out


if __name__ == "__main__":
    # Small, deterministic setup consistent with the module's __init__:
    vocab_size, embed_dim, max_seq_len = 64, 32, 16
    B, S = 2, 8

    key = jax.random.PRNGKey(0)
    k_tok, k_pos, k_ids = jax.random.split(key, 3)

    token_table = jax.random.normal(k_tok, (vocab_size, embed_dim), dtype=jnp.float32)
    pos_table = jax.random.normal(k_pos, (max_seq_len, embed_dim), dtype=jnp.float32)
    input_ids = jax.random.randint(k_ids, (B, S), 0, vocab_size, dtype=jnp.int32)

    out = embeddings_forward(input_ids, token_table, pos_table)
    out = jax.block_until_ready(out)

    # Reference check in plain JAX (eval-mode dropout == identity)
    ref = token_table[input_ids] + pos_table[jnp.arange(S)][None, :, :]
    assert out.shape == (B, S, embed_dim)
    assert jnp.allclose(out, ref, atol=1e-5, rtol=1e-5), "mismatch vs reference"

    print("KERNEL_OK")
</pallas_src>

<mosaic_0001>
module attributes {stable_mosaic.version = 11 : i64} {
  func.func @onehot_kernel(%arg0: i32, %arg1: memref<16x1xi32, #tpu.memory_space<vmem>>, %arg2: memref<64x128xf32, #tpu.memory_space<vmem>>, %arg3: memref<16x128xf32, #tpu.memory_space<vmem>>, %arg4: memref<16x128xf32, #tpu.memory_space<vmem>>) attributes {dimension_semantics = [#tpu.dimension_semantics<parallel>], iteration_bounds = array<i64: 1>, scalar_prefetch = 0 : i64, scratch_operands = 0 : i64, tpu.core_type = #tpu.core_type<tc>, window_params = [{transform_indices = @transform_0, window_bounds = array<i64: 16, 1>}, {pipeline_mode = #tpu.pipeline_mode<synchronous>, transform_indices = @transform_1, window_bounds = array<i64: 64, 128>}, {pipeline_mode = #tpu.pipeline_mode<synchronous>, transform_indices = @transform_2, window_bounds = array<i64: 16, 128>}, {transform_indices = @transform_3, window_bounds = array<i64: 16, 128>}]} {
    %c0 = arith.constant 0 : index
    %c0_0 = arith.constant 0 : index
    %0 = vector.load %arg1[%c0, %c0_0] : memref<16x1xi32, #tpu.memory_space<vmem>>, vector<16x1xi32>
    %1 = tpu.iota {dimensions = array<i32: 1>} : vector<16x64xi32>
    %2 = vector.broadcast %0 : vector<16x1xi32> to vector<16x64xi32>
    %3 = arith.cmpi eq, %2, %1 : vector<16x64xi32>
    %4 = arith.extui %3 : vector<16x64xi1> to vector<16x64xi32>
    %5 = arith.sitofp %4 : vector<16x64xi32> to vector<16x64xf32>
    %c0_1 = arith.constant 0 : index
    %c0_2 = arith.constant 0 : index
    %6 = vector.load %arg2[%c0_1, %c0_2] : memref<64x128xf32, #tpu.memory_space<vmem>>, vector<64x128xf32>
    %cst = arith.constant dense<0.000000e+00> : vector<16x128xf32>
    %7 = tpu.matmul %5, %6, %cst {dimension_numbers = #tpu.dot_dimension_numbers<[1], [0], [0], [1], [0, 0, 1, 1], [], []>, precision = #tpu.contract_precision<fp32>} : vector<16x64xf32>, vector<64x128xf32>, vector<16x128xf32> -> vector<16x128xf32>
    %c0_3 = arith.constant 0 : index
    %c0_4 = arith.constant 0 : index
    %8 = vector.load %arg3[%c0_3, %c0_4] : memref<16x128xf32, #tpu.memory_space<vmem>>, vector<16x128xf32>
    %9 = arith.addf %7, %8 : vector<16x128xf32>
    %c0_5 = arith.constant 0 : index
    %c0_6 = arith.constant 0 : index
    %10 = vector.load %arg4[%c0_5, %c0_6] : memref<16x128xf32, #tpu.memory_space<vmem>>, vector<16x128xf32>
    tpu.vector_store %arg4[%c0_5, %c0_6], %9 {strides = array<i32>} : memref<16x128xf32, #tpu.memory_space<vmem>>, vector<16x128xf32>,
    return
  }
  func.func @transform_0(%arg0: i32) -> (i32, i32) {
    %c0_i32 = arith.constant 0 : i32
    %c0_i32_0 = arith.constant 0 : i32
    return %arg0, %c0_i32 : i32, i32
  }
  func.func @transform_1(%arg0: i32) -> (i32, i32) {
    %c0_i32 = arith.constant 0 : i32
    %c0_i32_0 = arith.constant 0 : i32
    %c0_i32_1 = arith.constant 0 : i32
    return %c0_i32, %c0_i32_0 : i32, i32
  }
  func.func @transform_2(%arg0: i32) -> (i32, i32) {
    %c0_i32 = arith.constant 0 : i32
    %c0_i32_0 = arith.constant 0 : i32
    %c0_i32_1 = arith.constant 0 : i32
    return %c0_i32, %c0_i32_0 : i32, i32
  }
  func.func @transform_3(%arg0: i32) -> (i32, i32) {
    %c0_i32 = arith.constant 0 : i32
    %c0_i32_0 = arith.constant 0 : i32
    return %arg0, %c0_i32 : i32, i32
  }
}

</mosaic_0001>

<llo_original>
// kernel: tpu_custom_call.1
$region0: #{tpu_custom_call.1}
  #allocation0 [shape = 'u32[]', space=smem, size = 0x4, offset = 0x4, fixed_abs, tag = 'smem constant byte address 0x4 - core index']
  #allocation1 [shape = 'u32[144,128]{1,0:T(1,128)}', space=vmem, size = 0x12000, scoped, tag = 'internal scratch']
  %s0 = inlined_call_operand.vmem [shape: s32[16,1], index: 0, kind: input, shape index: {}]
  %s1 = inlined_call_operand.hbm [shape: f32[64,128], index: 1, kind: input, shape index: {}]
  %s2 = inlined_call_operand.vmem [shape: f32[16,128], index: 2, kind: input, shape index: {}]
  %s3 = inlined_call_operand.hbm [shape: f32[16,128], index: 3, kind: output, shape index: {}]
  %s4 = sld [smem:[#allocation0]]
  $region26: #{tpu_custom_call.1} parent=0
    _
  %s6 = ssub.s32 1, %s4
  %s7 = scalar_select 0, %s6, %s4
  $region1: #{tpu_custom_call.1} parent=0
    #allocation2 [shape = 'u8[32768]{0}', space=vmem, size = 0x8000, scoped, tag = 'input window, operand 1, single buffered']
    #allocation3 [shape = 's32[1]{0}', space=sflag, size = 0x4, scoped, tag = 'scoped memory for tpu_custom_call.1']
    #allocation4 [shape = 's32[1]{0}', space=sflag, size = 0x4, scoped, tag = 'scoped memory for tpu_custom_call.1']
    #allocation5 [shape = 'u8[8192]{0}', space=vmem, size = 0x2000, scoped, tag = 'output window, operand 0, single buffered']
    %8 = vsyncpa [#allocation3], 0
    %9 = vsyncpa [#allocation4], 0
    // Predicated region
    $region2: #{tpu_custom_call.1} parent=1 // pred_check
      _
    $region3: #{tpu_custom_call.1} parent=1 // pred_check_branch
      %11 = sbr.rel (0) target = $region5
    $region4: #{tpu_custom_call.1} parent=1 // pred_region
      _
    $region5: #{tpu_custom_call.1} parent=1 // pred_fallthru
      _
    // Predicated region
    $region6: #{tpu_custom_call.1} parent=1 // pred_check
      _
    $region7: #{tpu_custom_call.1} parent=1 // pred_check_branch
      %13 = sbr.rel (0) target = $region9
    $region8: #{tpu_custom_call.1} parent=1 // pred_region
      %s15 = ssub.s32 1024, 1024
      %16 = vsyncadd [#allocation3], %s15
      %s17 = sshll.u32 [#allocation2], 4
      %s18 = int_to_ptr.vmem [resolvable:$true] %s17
      %23 = dma.hbm_to_vmem [thread:$0]  %s1, 1024, %s18, [#allocation3], 128, 128, 8
    $region9: #{tpu_custom_call.1} parent=1 // pred_fallthru
      _
    // Predicated region
    $region10: #{tpu_custom_call.1} parent=1 // pred_check
      _
    $region11: #{tpu_custom_call.1} parent=1 // pred_check_branch
      %25 = sbr.rel (0) target = $region13
    $region12: #{tpu_custom_call.1} parent=1 // pred_region
      _
    $region13: #{tpu_custom_call.1} parent=1 // pred_fallthru
      _
    // Predicated region
    $region14: #{tpu_custom_call.1} parent=1 // pred_check
      _
    $region15: #{tpu_custom_call.1} parent=1 // pred_check_branch
      %27 = sbr.rel (0) target = $region17
    $region16: #{tpu_custom_call.1} parent=1 // pred_region
      %28 = dma.done [#allocation3], 1024
    $region17: #{tpu_custom_call.1} parent=1 // pred_fallthru
      _
    %v29 = vld [vmem:[%s0] sm:$0xff]
    %v30 = vld [vmem:[%s0 + $0x8] sm:$0xff]
    %v31 = vlaneseq
    %v32 = vand.u32 %v31, 127
    %33 = vset.pattern.permute.xlu0 0
    %34 = vperm.xlu0 %33, %v29
    %v35 = vpop.permute.xlu0 %34
    %36 = vset.pattern.permute.xlu0 0
    %37 = vperm.xlu0 %36, %v30
    %v38 = vpop.permute.xlu0 %37
    %vm39 = vcmp.eq.s32.totalorder %v35, %v32
    %vm40 = vcmp.eq.s32.totalorder %v38, %v32
    %v41 = vsel %vm39, 1, 0
    %v42 = vsel %vm40, 1, 0
    %v43 = vcvt.s32.f32 %v41
    %v44 = vcvt.s32.f32 %v42
    %v45 = vld [vmem:[#allocation2] sm:$0xff]
    %v46 = vld [vmem:[#allocation2 + $0x8] sm:$0xff]
    %v47 = vld [vmem:[#allocation2 + $0x10] sm:$0xff]
    %v48 = vld [vmem:[#allocation2 + $0x18] sm:$0xff]
    %v49 = vld [vmem:[#allocation2 + $0x20] sm:$0xff]
    %v50 = vld [vmem:[#allocation2 + $0x28] sm:$0xff]
    %v51 = vld [vmem:[#allocation2 + $0x30] sm:$0xff]
    %v52 = vld [vmem:[#allocation2 + $0x38] sm:$0xff]
    %v53 = vld [vmem:[%s2] sm:$0xff]
    %v54 = vld [vmem:[%s2 + $0x8] sm:$0xff]
    %vm55 = vcmask 523264
    %v57 = vsel %vm55, %v43, 0
    %v60 = vsel %vm55, %v44, 0
    %62 = vmatprep.subr.mxu0 0.0
    %63 = vmatpush1.msra.mxu0 0.0
    %64 = vmatprep.subr.mxu0 0.0
    %65 = vmatpush1.msra.mxu0 0.0
    %66 = vmatprep.subr.mxu0 0.0
    %67 = vmatpush1.msra.mxu0 0.0
    %68 = vmatprep.subr.mxu0 0.0
    %69 = vmatpush1.msra.mxu0 0.0
    %70 = vmatprep.subr.mxu0 0.0
    %71 = vmatpush1.msra.mxu0 0.0
    %72 = vmatprep.subr.mxu0 0.0
    %73 = vmatpush1.msra.mxu0 0.0
    %74 = vmatprep.subr.mxu0 0.0
    %75 = vmatpush1.msra.mxu0 0.0
    %76 = vmatprep.subr.mxu0 0.0
    %77 = vmatpush1.msra.mxu0 0.0
    %78 = vmatprep.subr.mxu0 0.0
    %v79 = vand.u32 %v52, 4294901760
    %80 = vmatpush1.msra.mxu0 %v79
    %81 = vmatprep.subr.mxu0 0.0
    %v82 = vand.u32 %v51, 4294901760
    %83 = vmatpush1.msra.mxu0 %v82
    %84 = vmatprep.subr.mxu0 0.0
    %v85 = vand.u32 %v50, 4294901760
    %86 = vmatpush1.msra.mxu0 %v85
    %87 = vmatprep.subr.mxu0 0.0
    %v88 = vand.u32 %v49, 4294901760
    %89 = vmatpush1.msra.mxu0 %v88
    %90 = vmatprep.subr.mxu0 0.0
    %v91 = vand.u32 %v48, 4294901760
    %92 = vmatpush1.msra.mxu0 %v91
    %93 = vmatprep.subr.mxu0 0.0
    %v94 = vand.u32 %v47, 4294901760
    %95 = vmatpush1.msra.mxu0 %v94
    %96 = vmatprep.subr.mxu0 0.0
    %v97 = vand.u32 %v46, 4294901760
    %98 = vmatpush1.msra.mxu0 %v97
    %99 = vmatprep.subr.mxu0 0.0
    %v100 = vand.u32 %v45, 4294901760
    %101 = vmatpush1.msra.mxu0 %v100
    %102 = vmatprep.subr.mxu0 0.0
    %103 = vmatpush2.msra.mxu0 0.0
    %104 = vmatprep.subr.mxu0 0.0
    %105 = vmatpush2.msra.mxu0 0.0
    %106 = vmatprep.subr.mxu0 0.0
    %107 = vmatpush2.msra.mxu0 0.0
    %108 = vmatprep.subr.mxu0 0.0
    %109 = vmatpush2.msra.mxu0 0.0
    %110 = vmatprep.subr.mxu0 0.0
    %111 = vmatpush2.msra.mxu0 0.0
    %112 = vmatprep.subr.mxu0 0.0
    %113 = vmatpush2.msra.mxu0 0.0
    %114 = vmatprep.subr.mxu0 0.0
    %115 = vmatpush2.msra.mxu0 0.0
    %116 = vmatprep.subr.mxu0 0.0
    %117 = vmatpush2.msra.mxu0 0.0
    %118 = vmatprep.subr.mxu0 0.0
    %119 = vmatpush2.msra.mxu0 0.0
    %120 = vmatprep.subr.mxu0 0.0
    %121 = vmatpush2.msra.mxu0 0.0
    %122 = vmatprep.subr.mxu0 0.0
    %123 = vmatpush2.msra.mxu0 0.0
    %124 = vmatprep.subr.mxu0 0.0
    %125 = vmatpush2.msra.mxu0 0.0
    %126 = vmatprep.subr.mxu0 0.0
    %127 = vmatpush2.msra.mxu0 0.0
    %128 = vmatprep.subr.mxu0 0.0
    %129 = vmatpush2.msra.mxu0 0.0
    %130 = vmatprep.subr.mxu0 0.0
    %131 = vmatpush2.msra.mxu0 0.0
    %132 = vmatprep.subr.mxu0 0.0
    %133 = vmatpush2.msra.mxu0 0.0
    %134 = vmatprep.mubr.f32.mxu0 0.0
    %v135 = vand.u32 %v57, 4294901760
    %v136 = vsub.f32 %v57, %v135
    %v137 = vand.u32 %v136, 4294901760
    %v138 = vsub.f32 %v136, %v137
    %v139 = vand.u32 %v138, 4294901760
    %140 = vmatmul.mubr.f32.gmra.mxu0 %v139
    %v141 = vpop.f32.mrf.mxu0
    %v142 = vadd.f32 %v53, %v141
    %v143 = vpop.f32.mrf.mxu0
    %144 = vmatprep.mubr.f32.mxu0 0.0
    %v145 = vand.u32 %v60, 4294901760
    %v146 = vsub.f32 %v60, %v145
    %v147 = vand.u32 %v146, 4294901760
    %v148 = vsub.f32 %v146, %v147
    %v149 = vand.u32 %v148, 4294901760
    %150 = vmatmul.mubr.f32.gmra.mxu0 %v149
    %v151 = vpop.f32.mrf.mxu0
    %v152 = vadd.f32 %v54, %v151
    %v153 = vpop.f32.mrf.mxu0
    %154 = vdwg.mxu0
    %155 = vmatprep.subr.mxu0 0.0
    %156 = vmatpush1.msra.mxu0 0.0
    %157 = vmatprep.subr.mxu0 0.0
    %158 = vmatpush1.msra.mxu0 0.0
    %159 = vmatprep.subr.mxu0 0.0
    %160 = vmatpush1.msra.mxu0 0.0
    %161 = vmatprep.subr.mxu0 0.0
    %162 = vmatpush1.msra.mxu0 0.0
    %163 = vmatprep.subr.mxu0 0.0
    %164 = vmatpush1.msra.mxu0 0.0
    %165 = vmatprep.subr.mxu0 0.0
    %166 = vmatpush1.msra.mxu0 0.0
    %167 = vmatprep.subr.mxu0 0.0
    %168 = vmatpush1.msra.mxu0 0.0
    %169 = vmatprep.subr.mxu0 0.0
    %170 = vmatpush1.msra.mxu0 0.0
    %171 = vmatprep.subr.mxu0 0.0
    %v172 = vand.u32 %v52, 4294901760
    %v173 = vsub.f32 %v52, %v172
    %v174 = vand.u32 %v173, 4294901760
    %v175 = vsub.f32 %v173, %v174
    %v176 = vand.u32 %v175, 4294901760
    %177 = vmatpush1.msra.mxu0 %v176
    %178 = vmatprep.subr.mxu0 0.0
    %v179 = vand.u32 %v51, 4294901760
    %v180 = vsub.f32 %v51, %v179
    %v181 = vand.u32 %v180, 4294901760
    %v182 = vsub.f32 %v180, %v181
    %v183 = vand.u32 %v182, 4294901760
    %184 = vmatpush1.msra.mxu0 %v183
    %185 = vmatprep.subr.mxu0 0.0
    %v186 = vand.u32 %v50, 4294901760
    %v187 = vsub.f32 %v50, %v186
    %v188 = vand.u32 %v187, 4294901760
    %v189 = vsub.f32 %v187, %v188
    %v190 = vand.u32 %v189, 4294901760
    %191 = vmatpush1.msra.mxu0 %v190
    %192 = vmatprep.subr.mxu0 0.0
    %v193 = vand.u32 %v49, 4294901760
    %v194 = vsub.f32 %v49, %v193
    %v195 = vand.u32 %v194, 4294901760
    %v196 = vsub.f32 %v194, %v195
    %v197 = vand.u32 %v196, 4294901760
    %198 = vmatpush1.msra.mxu0 %v197
    %199 = vmatprep.subr.mxu0 0.0
    %v200 = vand.u32 %v48, 4294901760
    %v201 = vsub.f32 %v48, %v200
    %v202 = vand.u32 %v201, 4294901760
    %v203 = vsub.f32 %v201, %v202
    %v204 = vand.u32 %v203, 4294901760
    %205 = vmatpush1.msra.mxu0 %v204
    %206 = vmatprep.subr.mxu0 0.0
    %v207 = vand.u32 %v47, 4294901760
    %v208 = vsub.f32 %v47, %v207
    %v209 = vand.u32 %v208, 4294901760
    %v210 = vsub.f32 %v208, %v209
    %v211 = vand.u32 %v210, 4294901760
    %212 = vmatpush1.msra.mxu0 %v211
    %213 = vmatprep.subr.mxu0 0.0
    %v214 = vand.u32 %v46, 4294901760
    %v215 = vsub.f32 %v46, %v214
    %v216 = vand.u32 %v215, 4294901760
    %v217 = vsub.f32 %v215, %v216
    %v218 = vand.u32 %v217, 4294901760
    %219 = vmatpush1.msra.mxu0 %v218
    %220 = vmatprep.subr.mxu0 0.0
    %v221 = vand.u32 %v45, 4294901760
    %v222 = vsub.f32 %v45, %v221
    %v223 = vand.u32 %v222, 4294901760
    %v224 = vsub.f32 %v222, %v223
    %v225 = vand.u32 %v224, 4294901760
    %226 = vmatpush1.msra.mxu0 %v225
    %227 = vmatprep.subr.mxu0 0.0
    %228 = vmatpush2.msra.mxu0 0.0
    %229 = vmatprep.subr.mxu0 0.0
    %230 = vmatpush2.msra.mxu0 0.0
    %231 = vmatprep.subr.mxu0 0.0
    %232 = vmatpush2.msra.mxu0 0.0
    %233 = vmatprep.subr.mxu0 0.0
    %234 = vmatpush2.msra.mxu0 0.0
    %235 = vmatprep.subr.mxu0 0.0
    %236 = vmatpush2.msra.mxu0 0.0
    %237 = vmatprep.subr.mxu0 0.0
    %238 = vmatpush2.msra.mxu0 0.0
    %239 = vmatprep.subr.mxu0 0.0
    %240 = vmatpush2.msra.mxu0 0.0
    %241 = vmatprep.subr.mxu0 0.0
    %242 = vmatpush2.msra.mxu0 0.0
    %243 = vmatprep.subr.mxu0 0.0
    %244 = vmatpush2.msra.mxu0 0.0
    %245 = vmatprep.subr.mxu0 0.0
    %246 = vmatpush2.msra.mxu0 0.0
    %247 = vmatprep.subr.mxu0 0.0
    %248 = vmatpush2.msra.mxu0 0.0
    %249 = vmatprep.subr.mxu0 0.0
    %250 = vmatpush2.msra.mxu0 0.0
    %251 = vmatprep.subr.mxu0 0.0
    %252 = vmatpush2.msra.mxu0 0.0
    %253 = vmatprep.subr.mxu0 0.0
    %254 = vmatpush2.msra.mxu0 0.0
    %255 = vmatprep.subr.mxu0 0.0
    %256 = vmatpush2.msra.mxu0 0.0
    %257 = vmatprep.subr.mxu0 0.0
    %258 = vmatpush2.msra.mxu0 0.0
    %259 = vmatprep.mubr.f32.mxu0 0.0
    %v260 = vand.u32 %v57, 4294901760
    %261 = vmatmul.mubr.f32.gmra.mxu0 %v260
    %v262 = vpop.f32.mrf.mxu0
    %v263 = vadd.f32 %v142, %v262
    %v264 = vpop.f32.mrf.mxu0
    %265 = vmatprep.mubr.f32.mxu0 0.0
    %v266 = vand.u32 %v60, 4294901760
    %267 = vmatmul.mubr.f32.gmra.mxu0 %v266
    %v268 = vpop.f32.mrf.mxu0
    %v269 = vadd.f32 %v152, %v268
    %v270 = vpop.f32.mrf.mxu0
    %271 = vdwg.mxu0
    %272 = vmatprep.subr.mxu0 0.0
    %273 = vmatpush1.msra.mxu0 0.0
    %274 = vmatprep.subr.mxu0 0.0
    %275 = vmatpush1.msra.mxu0 0.0
    %276 = vmatprep.subr.mxu0 0.0
    %277 = vmatpush1.msra.mxu0 0.0
    %278 = vmatprep.subr.mxu0 0.0
    %279 = vmatpush1.msra.mxu0 0.0
    %280 = vmatprep.subr.mxu0 0.0
    %281 = vmatpush1.msra.mxu0 0.0
    %282 = vmatprep.subr.mxu0 0.0
    %283 = vmatpush1.msra.mxu0 0.0
    %284 = vmatprep.subr.mxu0 0.0
    %285 = vmatpush1.msra.mxu0 0.0
    %286 = vmatprep.subr.mxu0 0.0
    %287 = vmatpush1.msra.mxu0 0.0
    %288 = vmatprep.subr.mxu0 0.0
    %v289 = vand.u32 %v52, 4294901760
    %v290 = vsub.f32 %v52, %v289
    %291 = vmatpush1.msra.mxu0 %v290
    %292 = vmatprep.subr.mxu0 0.0
    %v293 = vand.u32 %v51, 4294901760
    %v294 = vsub.f32 %v51, %v293
    %295 = vmatpush1.msra.mxu0 %v294
    %296 = vmatprep.subr.mxu0 0.0
    %v297 = vand.u32 %v50, 4294901760
    %v298 = vsub.f32 %v50, %v297
    %299 = vmatpush1.msra.mxu0 %v298
    %300 = vmatprep.subr.mxu0 0.0
    %v301 = vand.u32 %v49, 4294901760
    %v302 = vsub.f32 %v49, %v301
    %303 = vmatpush1.msra.mxu0 %v302
    %304 = vmatprep.subr.mxu0 0.0
    %v305 = vand.u32 %v48, 4294901760
    %v306 = vsub.f32 %v48, %v305
    %307 = vmatpush1.msra.mxu0 %v306
    %308 = vmatprep.subr.mxu0 0.0
    %v309 = vand.u32 %v47, 4294901760
    %v310 = vsub.f32 %v47, %v309
    %311 = vmatpush1.msra.mxu0 %v310
    %312 = vmatprep.subr.mxu0 0.0
    %v313 = vand.u32 %v46, 4294901760
    %v314 = vsub.f32 %v46, %v313
    %315 = vmatpush1.msra.mxu0 %v314
    %316 = vmatprep.subr.mxu0 0.0
    %v317 = vand.u32 %v45, 4294901760
    %v318 = vsub.f32 %v45, %v317
    %319 = vmatpush1.msra.mxu0 %v318
    %320 = vmatprep.subr.mxu0 0.0
    %321 = vmatpush2.msra.mxu0 0.0
    %322 = vmatprep.subr.mxu0 0.0
    %323 = vmatpush2.msra.mxu0 0.0
    %324 = vmatprep.subr.mxu0 0.0
    %325 = vmatpush2.msra.mxu0 0.0
    %326 = vmatprep.subr.mxu0 0.0
    %327 = vmatpush2.msra.mxu0 0.0
    %328 = vmatprep.subr.mxu0 0.0
    %329 = vmatpush2.msra.mxu0 0.0
    %330 = vmatprep.subr.mxu0 0.0
    %331 = vmatpush2.msra.mxu0 0.0
    %332 = vmatprep.subr.mxu0 0.0
    %333 = vmatpush2.msra.mxu0 0.0
    %334 = vmatprep.subr.mxu0 0.0
    %335 = vmatpush2.msra.mxu0 0.0
    %336 = vmatprep.subr.mxu0 0.0
    %337 = vmatpush2.msra.mxu0 0.0
    %338 = vmatprep.subr.mxu0 0.0
    %339 = vmatpush2.msra.mxu0 0.0
    %340 = vmatprep.subr.mxu0 0.0
    %341 = vmatpush2.msra.mxu0 0.0
    %342 = vmatprep.subr.mxu0 0.0
    %343 = vmatpush2.msra.mxu0 0.0
    %344 = vmatprep.subr.mxu0 0.0
    %345 = vmatpush2.msra.mxu0 0.0
    %346 = vmatprep.subr.mxu0 0.0
    %347 = vmatpush2.msra.mxu0 0.0
    %348 = vmatprep.subr.mxu0 0.0
    %349 = vmatpush2.msra.mxu0 0.0
    %350 = vmatprep.subr.mxu0 0.0
    %351 = vmatpush2.msra.mxu0 0.0
    %352 = vmatprep.mubr.f32.mxu0 0.0
    %v353 = vand.u32 %v57, 4294901760
    %v354 = vsub.f32 %v57, %v353
    %355 = vmatmul.mubr.f32.gmra.mxu0 %v354
    %v356 = vpop.f32.mrf.mxu0
    %v357 = vadd.f32 %v263, %v356
    %v358 = vpop.f32.mrf.mxu0
    %359 = vmatprep.mubr.f32.mxu0 0.0
    %v360 = vand.u32 %v60, 4294901760
    %v361 = vsub.f32 %v60, %v360
    %362 = vmatmul.mubr.f32.gmra.mxu0 %v361
    %v363 = vpop.f32.mrf.mxu0
    %v364 = vadd.f32 %v269, %v363
    %v365 = vpop.f32.mrf.mxu0
    %366 = vdwg.mxu0
    %367 = vmatprep.subr.mxu0 0.0
    %368 = vmatpush1.msra.mxu0 0.0
    %369 = vmatprep.subr.mxu0 0.0
    %370 = vmatpush1.msra.mxu0 0.0
    %371 = vmatprep.subr.mxu0 0.0
    %372 = vmatpush1.msra.mxu0 0.0
    %373 = vmatprep.subr.mxu0 0.0
    %374 = vmatpush1.msra.mxu0 0.0
    %375 = vmatprep.subr.mxu0 0.0
    %376 = vmatpush1.msra.mxu0 0.0
    %377 = vmatprep.subr.mxu0 0.0
    %378 = vmatpush1.msra.mxu0 0.0
    %379 = vmatprep.subr.mxu0 0.0
    %380 = vmatpush1.msra.mxu0 0.0
    %381 = vmatprep.subr.mxu0 0.0
    %382 = vmatpush1.msra.mxu0 0.0
    %383 = vmatprep.subr.mxu0 0.0
    %v384 = vand.u32 %v52, 4294901760
    %385 = vmatpush1.msra.mxu0 %v384
    %386 = vmatprep.subr.mxu0 0.0
    %v387 = vand.u32 %v51, 4294901760
    %388 = vmatpush1.msra.mxu0 %v387
    %389 = vmatprep.subr.mxu0 0.0
    %v390 = vand.u32 %v50, 4294901760
    %391 = vmatpush1.msra.mxu0 %v390
    %392 = vmatprep.subr.mxu0 0.0
    %v393 = vand.u32 %v49, 4294901760
    %394 = vmatpush1.msra.mxu0 %v393
    %395 = vmatprep.subr.mxu0 0.0
    %v396 = vand.u32 %v48, 4294901760
    %397 = vmatpush1.msra.mxu0 %v396
    %398 = vmatprep.subr.mxu0 0.0
    %v399 = vand.u32 %v47, 4294901760
    %400 = vmatpush1.msra.mxu0 %v399
    %401 = vmatprep.subr.mxu0 0.0
    %v402 = vand.u32 %v46, 4294901760
    %403 = vmatpush1.msra.mxu0 %v402
    %404 = vmatprep.subr.mxu0 0.0
    %v405 = vand.u32 %v45, 4294901760
    %406 = vmatpush1.msra.mxu0 %v405
    %407 = vmatprep.subr.mxu0 0.0
    %408 = vmatpush2.msra.mxu0 0.0
    %409 = vmatprep.subr.mxu0 0.0
    %410 = vmatpush2.msra.mxu0 0.0
    %411 = vmatprep.subr.mxu0 0.0
    %412 = vmatpush2.msra.mxu0 0.0
    %413 = vmatprep.subr.mxu0 0.0
    %414 = vmatpush2.msra.mxu0 0.0
    %415 = vmatprep.subr.mxu0 0.0
    %416 = vmatpush2.msra.mxu0 0.0
    %417 = vmatprep.subr.mxu0 0.0
    %418 = vmatpush2.msra.mxu0 0.0
    %419 = vmatprep.subr.mxu0 0.0
    %420 = vmatpush2.msra.mxu0 0.0
    %421 = vmatprep.subr.mxu0 0.0
    %422 = vmatpush2.msra.mxu0 0.0
    %423 = vmatprep.subr.mxu0 0.0
    %424 = vmatpush2.msra.mxu0 0.0
    %425 = vmatprep.subr.mxu0 0.0
    %426 = vmatpush2.msra.mxu0 0.0
    %427 = vmatprep.subr.mxu0 0.0
    %428 = vmatpush2.msra.mxu0 0.0
    %429 = vmatprep.subr.mxu0 0.0
    %430 = vmatpush2.msra.mxu0 0.0
    %431 = vmatprep.subr.mxu0 0.0
    %432 = vmatpush2.msra.mxu0 0.0
    %433 = vmatprep.subr.mxu0 0.0
    %434 = vmatpush2.msra.mxu0 0.0
    %435 = vmatprep.subr.mxu0 0.0
    %436 = vmatpush2.msra.mxu0 0.0
    %437 = vmatprep.subr.mxu0 0.0
    %438 = vmatpush2.msra.mxu0 0.0
    %439 = vmatprep.mubr.f32.mxu0 0.0
    %v440 = vand.u32 %v57, 4294901760
    %v441 = vsub.f32 %v57, %v440
    %v442 = vand.u32 %v441, 4294901760
    %443 = vmatmul.mubr.f32.gmra.mxu0 %v442
    %v444 = vpop.f32.mrf.mxu0
    %v445 = vadd.f32 %v357, %v444
    %v446 = vpop.f32.mrf.mxu0
    %447 = vmatprep.mubr.f32.mxu0 0.0
    %v448 = vand.u32 %v60, 4294901760
    %v449 = vsub.f32 %v60, %v448
    %v450 = vand.u32 %v449, 4294901760
    %451 = vmatmul.mubr.f32.gmra.mxu0 %v450
    %v452 = vpop.f32.mrf.mxu0
    %v453 = vadd.f32 %v364, %v452
    %v454 = vpop.f32.mrf.mxu0
    %455 = vdwg.mxu0
    %456 = vmatprep.subr.mxu0 0.0
    %457 = vmatpush1.msra.mxu0 0.0
    %458 = vmatprep.subr.mxu0 0.0
    %459 = vmatpush1.msra.mxu0 0.0
    %460 = vmatprep.subr.mxu0 0.0
    %461 = vmatpush1.msra.mxu0 0.0
    %462 = vmatprep.subr.mxu0 0.0
    %463 = vmatpush1.msra.mxu0 0.0
    %464 = vmatprep.subr.mxu0 0.0
    %465 = vmatpush1.msra.mxu0 0.0
    %466 = vmatprep.subr.mxu0 0.0
    %467 = vmatpush1.msra.mxu0 0.0
    %468 = vmatprep.subr.mxu0 0.0
    %469 = vmatpush1.msra.mxu0 0.0
    %470 = vmatprep.subr.mxu0 0.0
    %471 = vmatpush1.msra.mxu0 0.0
    %472 = vmatprep.subr.mxu0 0.0
    %v473 = vand.u32 %v52, 4294901760
    %v474 = vsub.f32 %v52, %v473
    %v475 = vand.u32 %v474, 4294901760
    %476 = vmatpush1.msra.mxu0 %v475
    %477 = vmatprep.subr.mxu0 0.0
    %v478 = vand.u32 %v51, 4294901760
    %v479 = vsub.f32 %v51, %v478
    %v480 = vand.u32 %v479, 4294901760
    %481 = vmatpush1.msra.mxu0 %v480
    %482 = vmatprep.subr.mxu0 0.0
    %v483 = vand.u32 %v50, 4294901760
    %v484 = vsub.f32 %v50, %v483
    %v485 = vand.u32 %v484, 4294901760
    %486 = vmatpush1.msra.mxu0 %v485
    %487 = vmatprep.subr.mxu0 0.0
    %v488 = vand.u32 %v49, 4294901760
    %v489 = vsub.f32 %v49, %v488
    %v490 = vand.u32 %v489, 4294901760
    %491 = vmatpush1.msra.mxu0 %v490
    %492 = vmatprep.subr.mxu0 0.0
    %v493 = vand.u32 %v48, 4294901760
    %v494 = vsub.f32 %v48, %v493
    %v495 = vand.u32 %v494, 4294901760
    %496 = vmatpush1.msra.mxu0 %v495
    %497 = vmatprep.subr.mxu0 0.0
    %v498 = vand.u32 %v47, 4294901760
    %v499 = vsub.f32 %v47, %v498
    %v500 = vand.u32 %v499, 4294901760
    %501 = vmatpush1.msra.mxu0 %v500
    %502 = vmatprep.subr.mxu0 0.0
    %v503 = vand.u32 %v46, 4294901760
    %v504 = vsub.f32 %v46, %v503
    %v505 = vand.u32 %v504, 4294901760
    %506 = vmatpush1.msra.mxu0 %v505
    %507 = vmatprep.subr.mxu0 0.0
    %v508 = vand.u32 %v45, 4294901760
    %v509 = vsub.f32 %v45, %v508
    %v510 = vand.u32 %v509, 4294901760
    %511 = vmatpush1.msra.mxu0 %v510
    %512 = vmatprep.subr.mxu0 0.0
    %513 = vmatpush2.msra.mxu0 0.0
    %514 = vmatprep.subr.mxu0 0.0
    %515 = vmatpush2.msra.mxu0 0.0
    %516 = vmatprep.subr.mxu0 0.0
    %517 = vmatpush2.msra.mxu0 0.0
    %518 = vmatprep.subr.mxu0 0.0
    %519 = vmatpush2.msra.mxu0 0.0
    %520 = vmatprep.subr.mxu0 0.0
    %521 = vmatpush2.msra.mxu0 0.0
    %522 = vmatprep.subr.mxu0 0.0
    %523 = vmatpush2.msra.mxu0 0.0
    %524 = vmatprep.subr.mxu0 0.0
    %525 = vmatpush2.msra.mxu0 0.0
    %526 = vmatprep.subr.mxu0 0.0
    %527 = vmatpush2.msra.mxu0 0.0
    %528 = vmatprep.subr.mxu0 0.0
    %529 = vmatpush2.msra.mxu0 0.0
    %530 = vmatprep.subr.mxu0 0.0
    %531 = vmatpush2.msra.mxu0 0.0
    %532 = vmatprep.subr.mxu0 0.0
    %533 = vmatpush2.msra.mxu0 0.0
    %534 = vmatprep.subr.mxu0 0.0
    %535 = vmatpush2.msra.mxu0 0.0
    %536 = vmatprep.subr.mxu0 0.0
    %537 = vmatpush2.msra.mxu0 0.0
    %538 = vmatprep.subr.mxu0 0.0
    %539 = vmatpush2.msra.mxu0 0.0
    %540 = vmatprep.subr.mxu0 0.0
    %541 = vmatpush2.msra.mxu0 0.0
    %542 = vmatprep.subr.mxu0 0.0
    %543 = vmatpush2.msra.mxu0 0.0
    %544 = vmatprep.mubr.f32.mxu0 0.0
    %v545 = vand.u32 %v57, 4294901760
    %546 = vmatmul.mubr.f32.gmra.mxu0 %v545
    %v547 = vpop.f32.mrf.mxu0
    %v548 = vadd.f32 %v445, %v547
    %v549 = vpop.f32.mrf.mxu0
    %550 = vmatprep.mubr.f32.mxu0 0.0
    %v551 = vand.u32 %v60, 4294901760
    %552 = vmatmul.mubr.f32.gmra.mxu0 %v551
    %v553 = vpop.f32.mrf.mxu0
    %v554 = vadd.f32 %v453, %v553
    %v555 = vpop.f32.mrf.mxu0
    %556 = vdwg.mxu0
    %557 = vmatprep.subr.mxu0 0.0
    %558 = vmatpush1.msra.mxu0 0.0
    %559 = vmatprep.subr.mxu0 0.0
    %560 = vmatpush1.msra.mxu0 0.0
    %561 = vmatprep.subr.mxu0 0.0
    %562 = vmatpush1.msra.mxu0 0.0
    %563 = vmatprep.subr.mxu0 0.0
    %564 = vmatpush1.msra.mxu0 0.0
    %565 = vmatprep.subr.mxu0 0.0
    %566 = vmatpush1.msra.mxu0 0.0
    %567 = vmatprep.subr.mxu0 0.0
    %568 = vmatpush1.msra.mxu0 0.0
    %569 = vmatprep.subr.mxu0 0.0
    %570 = vmatpush1.msra.mxu0 0.0
    %571 = vmatprep.subr.mxu0 0.0
    %572 = vmatpush1.msra.mxu0 0.0
    %573 = vmatprep.subr.mxu0 0.0
    %v574 = vand.u32 %v52, 4294901760
    %575 = vmatpush1.msra.mxu0 %v574
    %576 = vmatprep.subr.mxu0 0.0
    %v577 = vand.u32 %v51, 4294901760
    %578 = vmatpush1.msra.mxu0 %v577
    %579 = vmatprep.subr.mxu0 0.0
    %v580 = vand.u32 %v50, 4294901760
    %581 = vmatpush1.msra.mxu0 %v580
    %582 = vmatprep.subr.mxu0 0.0
    %v583 = vand.u32 %v49, 4294901760
    %584 = vmatpush1.msra.mxu0 %v583
    %585 = vmatprep.subr.mxu0 0.0
    %v586 = vand.u32 %v48, 4294901760
    %587 = vmatpush1.msra.mxu0 %v586
    %588 = vmatprep.subr.mxu0 0.0
    %v589 = vand.u32 %v47, 4294901760
    %590 = vmatpush1.msra.mxu0 %v589
    %591 = vmatprep.subr.mxu0 0.0
    %v592 = vand.u32 %v46, 4294901760
    %593 = vmatpush1.msra.mxu0 %v592
    %594 = vmatprep.subr.mxu0 0.0
    %v595 = vand.u32 %v45, 4294901760
    %596 = vmatpush1.msra.mxu0 %v595
    %597 = vmatprep.subr.mxu0 0.0
    %598 = vmatpush2.msra.mxu0 0.0
    %599 = vmatprep.subr.mxu0 0.0
    %600 = vmatpush2.msra.mxu0 0.0
    %601 = vmatprep.subr.mxu0 0.0
    %602 = vmatpush2.msra.mxu0 0.0
    %603 = vmatprep.subr.mxu0 0.0
    %604 = vmatpush2.msra.mxu0 0.0
    %605 = vmatprep.subr.mxu0 0.0
    %606 = vmatpush2.msra.mxu0 0.0
    %607 = vmatprep.subr.mxu0 0.0
    %608 = vmatpush2.msra.mxu0 0.0
    %609 = vmatprep.subr.mxu0 0.0
    %610 = vmatpush2.msra.mxu0 0.0
    %611 = vmatprep.subr.mxu0 0.0
    %612 = vmatpush2.msra.mxu0 0.0
    %613 = vmatprep.subr.mxu0 0.0
    %614 = vmatpush2.msra.mxu0 0.0
    %615 = vmatprep.subr.mxu0 0.0
    %616 = vmatpush2.msra.mxu0 0.0
    %617 = vmatprep.subr.mxu0 0.0
    %618 = vmatpush2.msra.mxu0 0.0
    %619 = vmatprep.subr.mxu0 0.0
    %620 = vmatpush2.msra.mxu0 0.0
    %621 = vmatprep.subr.mxu0 0.0
    %622 = vmatpush2.msra.mxu0 0.0
    %623 = vmatprep.subr.mxu0 0.0
    %624 = vmatpush2.msra.mxu0 0.0
    %625 = vmatprep.subr.mxu0 0.0
    %626 = vmatpush2.msra.mxu0 0.0
    %627 = vmatprep.subr.mxu0 0.0
    %628 = vmatpush2.msra.mxu0 0.0
    %629 = vmatprep.mubr.f32.mxu0 0.0
    %v630 = vand.u32 %v57, 4294901760
    %631 = vmatmul.mubr.f32.gmra.mxu0 %v630
    %v632 = vpop.f32.mrf.mxu0
    %v633 = vadd.f32 %v548, %v632
    %v634 = vpop.f32.mrf.mxu0
    %635 = vmatprep.mubr.f32.mxu0 0.0
    %v636 = vand.u32 %v60, 4294901760
    %637 = vmatmul.mubr.f32.gmra.mxu0 %v636
    %v638 = vpop.f32.mrf.mxu0
    %v639 = vadd.f32 %v554, %v638
    %v640 = vpop.f32.mrf.mxu0
    %641 = vdwg.mxu0
    %642 = vst [vmem:[#allocation5] sm:$0xff] %v633
    %643 = vst [vmem:[#allocation5 + $0x8] sm:$0xff] %v639
    // Predicated region
    $region18: #{tpu_custom_call.1} parent=1 // pred_check
      _
    $region19: #{tpu_custom_call.1} parent=1 // pred_check_branch
      %645 = sbr.rel (0) target = $region21
    $region20: #{tpu_custom_call.1} parent=1 // pred_region
      %s647 = ssub.s32 256, 256
      %648 = vsyncadd [#allocation4], %s647
      %s649 = sshll.u32 [#allocation5], 4
      %s650 = int_to_ptr.vmem [resolvable:$true] %s649
      %655 = dma.vmem_to_hbm [thread:$0]  %s650, 256, %s3, [#allocation4], 128, 128, 8
    $region21: #{tpu_custom_call.1} parent=1 // pred_fallthru
      _
    // Predicated region
    $region22: #{tpu_custom_call.1} parent=1 // pred_check
      _
    $region23: #{tpu_custom_call.1} parent=1 // pred_check_branch
      %657 = sbr.rel (0) target = $region25
    $region24: #{tpu_custom_call.1} parent=1 // pred_region
      %658 = dma.done [#allocation4], 256
    $region25: #{tpu_custom_call.1} parent=1 // pred_fallthru
      _
    %659 = vsyncpa [#allocation3], 1
    %660 = vsyncpa [#allocation4], 1

</llo_original>
